<compile_context>
chip_gen: v6e
topology: v6e:2x2x1
jax: 0.10.0
libtpu: 0.0.40
codegen_flags: <defaults>
</compile_context>

<pallas_src>
import jax
import jax.numpy as jnp
from jax import lax
from jax.experimental import pallas as pl
from jax.experimental.pallas import tpu as pltpu


def _model_local_kernel(c_ref, w_ref, xt_ref, o_ref):
    # c_ref : SMEM (1,)            folded bias   = beta * sum(w) + b
    # w_ref : VMEM (1, T)          folded weight = gamma * w   (resident block)
    # xt_ref: VMEM (T, row_tile)   lane-major tile of x^T
    # o_ref : VMEM (1, row_tile)   lane-dense output row
    f = jnp.dot(w_ref[...], xt_ref[...], preferred_element_type=jnp.float32)
    o_ref[...] = f + c_ref[0]


def _round_up(v, m):
    return ((v + m - 1) // m) * m


_TARGET_TILE_BYTES = 4 * 1024 * 1024   # per x_t buffer (pipeline double-buffers)
_MIN_GRID_STEPS = 4                    # >= 2 grid steps per TensorCore on v7x


def _choose_row_tile(n_rows, t_local):
    if n_rows <= 128:
        return max(int(n_rows), 1)      # single full block (tiny N, masked stores)
    sublanes = _round_up(t_local, 8)
    cap = max(128, (_TARGET_TILE_BYTES // (4 * sublanes)) // 128 * 128)
    tile = _round_up(pl.cdiv(n_rows, _MIN_GRID_STEPS), 128)
    return int(min(max(tile, 128), cap))


def model_local_forward_t(x_t, w_local, b_local, gamma_local, beta_local,
                          *, row_tile=None):
    """Performance path.  x_t is x transposed, shape (T_local, N); returns (N,)."""
    x_t = jnp.asarray(x_t, jnp.float32)
    w_local = jnp.asarray(w_local, jnp.float32)
    T, N = x_t.shape
    assert w_local.shape == (T, 1)

    # ---- Fold the scalar affine into the weights / bias (host side) ----
    gamma = jnp.asarray(gamma_local, jnp.float32).reshape(())
    beta = jnp.asarray(beta_local, jnp.float32).reshape(())
    bias = jnp.asarray(b_local, jnp.float32).reshape(())
    w_folded = (gamma * w_local).reshape(1, T)                # (1, T) lane-major
    c_folded = (beta * jnp.sum(w_local) + bias).reshape(1)    # SMEM scalar

    # ---- Lane (row) tiling ----
    if row_tile is None:
        row_tile = _choose_row_tile(N, T)
    assert row_tile == N or row_tile % 128 == 0, (
        "row_tile must be a multiple of 128 (lane-dense stores) or equal to N")
    grid_rows = pl.cdiv(N, row_tile)
    padded_n = grid_rows * row_tile

    cost = pl.CostEstimate(
        flops=2 * N * T,
        transcendentals=0,
        bytes_accessed=4 * (_round_up(T, 8) * _round_up(N, 128)   # x_t (physical)
                            + 8 * 128                             # folded weight
                            + _round_up(padded_n, 128)),          # output slab
    )

    out = pl.pallas_call(
        _model_local_kernel,
        out_shape=jax.ShapeDtypeStruct((1, padded_n), jnp.float32),
        grid=(grid_rows,),
        in_specs=[
            pl.BlockSpec(memory_space=pltpu.MemorySpace.SMEM),     # folded bias
            pl.BlockSpec((1, T), lambda i: (0, 0)),                # folded weight
            pl.BlockSpec((T, row_tile), lambda i: (0, i)),         # x^T lane tile
        ],
        out_specs=pl.BlockSpec((1, row_tile), lambda i: (0, i)),
        compiler_params=pltpu.CompilerParams(
            # NOTE(v7x): plain "parallel" lets Mosaic shard the grid across the
            # two TensorCores; tile selection guarantees >= 4 steps for large N.
            dimension_semantics=("parallel",)),
        cost_estimate=cost,
    )(c_folded, w_folded, x_t)

    # Drop the padded tail lanes; stay flat / lane-major for downstream consumers.
    return out[0, :N]


def model_local_forward(x, w_local, b_local, gamma_local, beta_local,
                        *, row_tile=None):
    """Module-parity path: x is (N, T_local); returns (N, 1) like the PyTorch module.

    The x transpose and the final (N, 1) column layout are relayouts done by XLA
    outside the kernel; callers that control the data layout should keep x as
    (T, N) and consume the flat (N,) result via `model_local_forward_t`.
    """
    x = jnp.asarray(x, jnp.float32)
    f = model_local_forward_t(x.T, w_local, b_local, gamma_local, beta_local,
                              row_tile=row_tile)
    return f[:, None]


def model_local_ref(x, w_local, b_local, gamma_local, beta_local):
    xa = gamma_local * x + beta_local
    return jnp.dot(xa, w_local, precision=lax.Precision.HIGHEST) + b_local


if __name__ == "__main__":
    key = jax.random.PRNGKey(0)
    k_w, k_x1, k_x2, k_x3 = jax.random.split(key, 4)

    T_local = 32

    # Parameters (learnable in the PyTorch module); non-trivial gamma/beta so the
    # affine-folding path is actually exercised.
    w_local = 0.01 * jax.random.normal(k_w, (T_local, 1), dtype=jnp.float32)
    b_local = jnp.full((1,), 0.05, dtype=jnp.float32)
    gamma_local = jnp.full((1,), 1.7, dtype=jnp.float32)
    beta_local = jnp.full((1,), -0.3, dtype=jnp.float32)

    # Case 1: tiny batch -> single full block.
    N1 = 8
    x1 = jax.random.normal(k_x1, (N1, T_local), dtype=jnp.float32)
    out1 = jax.block_until_ready(
        model_local_forward(x1, w_local, b_local, gamma_local, beta_local))
    ref1 = model_local_ref(x1, w_local, b_local, gamma_local, beta_local)
    assert out1.shape == (N1, 1)
    assert jnp.allclose(out1, ref1, atol=1e-4, rtol=1e-4), "mismatch (case 1)"

    # Case 2: auto tiling, 128-lane tiles, partial tail block (300 = 2*128 + 44).
    N2 = 300
    x2 = jax.random.normal(k_x2, (N2, T_local), dtype=jnp.float32)
    out2 = jax.block_until_ready(
        model_local_forward(x2, w_local, b_local, gamma_local, beta_local))
    ref2 = model_local_ref(x2, w_local, b_local, gamma_local, beta_local)
    assert out2.shape == (N2, 1)
    assert jnp.allclose(out2, ref2, atol=1e-4, rtol=1e-4), "mismatch (case 2)"

    # Case 3: lane-major fast path (x already transposed), explicit 128-row tile,
    # multi-step "parallel" grid, flat output.
    N3 = 512
    x3 = jax.random.normal(k_x3, (N3, T_local), dtype=jnp.float32)
    out3 = jax.block_until_ready(
        model_local_forward_t(x3.T, w_local, b_local, gamma_local, beta_local,
                              row_tile=128))
    ref3 = model_local_ref(x3, w_local, b_local, gamma_local, beta_local)[:, 0]
    assert out3.shape == (N3,)
    assert jnp.allclose(out3, ref3, atol=1e-4, rtol=1e-4), "mismatch (case 3)"

    print("KERNEL_OK")
</pallas_src>

<mosaic_0001>
module attributes {stable_mosaic.version = 11 : i64} {
  func.func @_model_local_kernel(%arg0: i32, %arg1: memref<1xf32, #tpu.memory_space<smem>>, %arg2: memref<1x32xf32, #tpu.memory_space<vmem>>, %arg3: memref<32x8xf32, #tpu.memory_space<vmem>>, %arg4: memref<1x8xf32, #tpu.memory_space<vmem>>) attributes {dimension_semantics = [#tpu.dimension_semantics<parallel>], iteration_bounds = array<i64: 1>, scalar_prefetch = 0 : i64, scratch_operands = 0 : i64, tpu.core_type = #tpu.core_type<tc>, window_params = [{transform_indices = @transform_0, window_bounds = array<i64: 1>}, {pipeline_mode = #tpu.pipeline_mode<synchronous>, transform_indices = @transform_1, window_bounds = array<i64: 1, 32>}, {transform_indices = @transform_2, window_bounds = array<i64: 32, 8>}, {transform_indices = @transform_3, window_bounds = array<i64: 1, 8>}]} {
    %c0 = arith.constant 0 : index
    %c0_0 = arith.constant 0 : index
    %0 = vector.load %arg2[%c0, %c0_0] : memref<1x32xf32, #tpu.memory_space<vmem>>, vector<1x32xf32>
    %c0_1 = arith.constant 0 : index
    %c0_2 = arith.constant 0 : index
    %1 = vector.load %arg3[%c0_1, %c0_2] : memref<32x8xf32, #tpu.memory_space<vmem>>, vector<32x8xf32>
    %cst = arith.constant dense<0.000000e+00> : vector<1x8xf32>
    %2 = tpu.matmul %0, %1, %cst {dimension_numbers = #tpu.dot_dimension_numbers<[1], [0], [0], [1], [0, 0, 1, 1], [], []>} : vector<1x32xf32>, vector<32x8xf32>, vector<1x8xf32> -> vector<1x8xf32>
    %c0_3 = arith.constant 0 : index
    %3 = memref.load %arg1[%c0_3] : memref<1xf32, #tpu.memory_space<smem>>
    %4 = vector.broadcast %3 : f32 to vector<1x8xf32>
    %5 = arith.addf %2, %4 : vector<1x8xf32>
    %c0_4 = arith.constant 0 : index
    %c0_5 = arith.constant 0 : index
    %6 = vector.load %arg4[%c0_4, %c0_5] : memref<1x8xf32, #tpu.memory_space<vmem>>, vector<1x8xf32>
    tpu.vector_store %arg4[%c0_4, %c0_5], %5 {strides = array<i32>} : memref<1x8xf32, #tpu.memory_space<vmem>>, vector<1x8xf32>,
    return
  }
  func.func @transform_0(%arg0: i32) -> i32 {
    %c0_i32 = arith.constant 0 : i32
    %c0_i32_0 = arith.constant 0 : i32
    return %c0_i32 : i32
  }
  func.func @transform_1(%arg0: i32) -> (i32, i32) {
    %c0_i32 = arith.constant 0 : i32
    %c0_i32_0 = arith.constant 0 : i32
    %c0_i32_1 = arith.constant 0 : i32
    return %c0_i32, %c0_i32_0 : i32, i32
  }
  func.func @transform_2(%arg0: i32) -> (i32, i32) {
    %c0_i32 = arith.constant 0 : i32
    %c0_i32_0 = arith.constant 0 : i32
    return %c0_i32, %arg0 : i32, i32
  }
  func.func @transform_3(%arg0: i32) -> (i32, i32) {
    %c0_i32 = arith.constant 0 : i32
    %c0_i32_0 = arith.constant 0 : i32
    return %c0_i32, %arg0 : i32, i32
  }
}

</mosaic_0001>

<llo_original>
// kernel: tpu_custom_call.1
$region0: #{tpu_custom_call.1}
  #allocation0 [shape = 'u32[]', space=smem, size = 0x4, offset = 0x4, fixed_abs, tag = 'smem constant byte address 0x4 - core index']
  #allocation1 [shape = 'u32[144,128]{1,0:T(1,128)}', space=vmem, size = 0x12000, scoped, tag = 'internal scratch']
  #allocation2 [shape = 'f32[1]{0:T(128)S(6)}', space=smem, size = 0x200, scoped, tag = 'scoped memory for tpu_custom_call.1']
  %s0 = inlined_call_operand.<no memory space> [shape: f32[1], index: 0, kind: input, shape index: {}]
  %s1 = inlined_call_operand.vmem [shape: f32[1,32], index: 1, kind: input, shape index: {}]
  %s2 = inlined_call_operand.vmem [shape: f32[32,8], index: 2, kind: input, shape index: {}]
  %s3 = inlined_call_operand.hbm [shape: f32[1,8], index: 3, kind: output, shape index: {}]
  %s4 = sld [smem:[#allocation0]]
  $region22: #{tpu_custom_call.1} parent=0
    _
  %s6 = ssub.s32 1, %s4
  %s7 = scalar_select 0, %s6, %s4
  %8 = sst [smem:[#allocation2]] %s0
  $region1: #{tpu_custom_call.1} parent=0
    #allocation3 [shape = 'u8[512]{0}', space=vmem, size = 0x400, scoped, tag = 'output window, operand 0, single buffered']
    #allocation4 [shape = 's32[1]{0}', space=sflag, size = 0x4, scoped, tag = 'scoped memory for tpu_custom_call.1']
    %9 = vsyncpa [#allocation4], 0
    // Predicated region
    $region2: #{tpu_custom_call.1} parent=1 // pred_check
      _
    $region3: #{tpu_custom_call.1} parent=1 // pred_check_branch
      %11 = sbr.rel (0) target = $region5
    $region4: #{tpu_custom_call.1} parent=1 // pred_region
      _
    $region5: #{tpu_custom_call.1} parent=1 // pred_fallthru
      _
    // Predicated region
    $region6: #{tpu_custom_call.1} parent=1 // pred_check
      _
    $region7: #{tpu_custom_call.1} parent=1 // pred_check_branch
      %13 = sbr.rel (0) target = $region9
    $region8: #{tpu_custom_call.1} parent=1 // pred_region
      _
    $region9: #{tpu_custom_call.1} parent=1 // pred_fallthru
      _
    // Predicated region
    $region10: #{tpu_custom_call.1} parent=1 // pred_check
      _
    $region11: #{tpu_custom_call.1} parent=1 // pred_check_branch
      %15 = sbr.rel (0) target = $region13
    $region12: #{tpu_custom_call.1} parent=1 // pred_region
      _
    $region13: #{tpu_custom_call.1} parent=1 // pred_fallthru
      _
    %v16 = vld [vmem:[%s1] sm:$0x1]
    %v17 = vld [vmem:[%s2] sm:$0xff]
    %v18 = vld [vmem:[%s2 + $0x8] sm:$0xff]
    %v19 = vld [vmem:[%s2 + $0x10] sm:$0xff]
    %v20 = vld [vmem:[%s2 + $0x18] sm:$0xff]
    %s21 = sld [smem:[#allocation2]]
    %v22 = vstv %s21
    %vm23 = vcmask 261120
    %v25 = vsel %vm23, %v16, 0
    %27 = vmatprep.subr.mxu0 0.0
    %28 = vmatpush1.msra.mxu0 0.0
    %29 = vmatprep.subr.mxu0 0.0
    %30 = vmatpush1.msra.mxu0 0.0
    %31 = vmatprep.subr.mxu0 0.0
    %32 = vmatpush1.msra.mxu0 0.0
    %33 = vmatprep.subr.mxu0 0.0
    %34 = vmatpush1.msra.mxu0 0.0
    %35 = vmatprep.subr.mxu0 0.0
    %36 = vmatpush1.msra.mxu0 0.0
    %37 = vmatprep.subr.mxu0 0.0
    %38 = vmatpush1.msra.mxu0 0.0
    %39 = vmatprep.subr.mxu0 0.0
    %40 = vmatpush1.msra.mxu0 0.0
    %41 = vmatprep.subr.mxu0 0.0
    %42 = vmatpush1.msra.mxu0 0.0
    %43 = vmatprep.subr.mxu0 0.0
    %44 = vmatpush1.msra.mxu0 0.0
    %45 = vmatprep.subr.mxu0 0.0
    %46 = vmatpush1.msra.mxu0 0.0
    %47 = vmatprep.subr.mxu0 0.0
    %48 = vmatpush1.msra.mxu0 0.0
    %49 = vmatprep.subr.mxu0 0.0
    %50 = vmatpush1.msra.mxu0 0.0
    %51 = vmatprep.subr.mxu0 0.0
    %52 = vmatpush1.msra.mxu0 %v20
    %53 = vmatprep.subr.mxu0 0.0
    %54 = vmatpush1.msra.mxu0 %v19
    %55 = vmatprep.subr.mxu0 0.0
    %56 = vmatpush1.msra.mxu0 %v18
    %57 = vmatprep.subr.mxu0 0.0
    %58 = vmatpush1.msra.mxu0 %v17
    %59 = vmatprep.subr.mxu0 0.0
    %60 = vmatpush2.msra.mxu0 0.0
    %61 = vmatprep.subr.mxu0 0.0
    %62 = vmatpush2.msra.mxu0 0.0
    %63 = vmatprep.subr.mxu0 0.0
    %64 = vmatpush2.msra.mxu0 0.0
    %65 = vmatprep.subr.mxu0 0.0
    %66 = vmatpush2.msra.mxu0 0.0
    %67 = vmatprep.subr.mxu0 0.0
    %68 = vmatpush2.msra.mxu0 0.0
    %69 = vmatprep.subr.mxu0 0.0
    %70 = vmatpush2.msra.mxu0 0.0
    %71 = vmatprep.subr.mxu0 0.0
    %72 = vmatpush2.msra.mxu0 0.0
    %73 = vmatprep.subr.mxu0 0.0
    %74 = vmatpush2.msra.mxu0 0.0
    %75 = vmatprep.subr.mxu0 0.0
    %76 = vmatpush2.msra.mxu0 0.0
    %77 = vmatprep.subr.mxu0 0.0
    %78 = vmatpush2.msra.mxu0 0.0
    %79 = vmatprep.subr.mxu0 0.0
    %80 = vmatpush2.msra.mxu0 0.0
    %81 = vmatprep.subr.mxu0 0.0
    %82 = vmatpush2.msra.mxu0 0.0
    %83 = vmatprep.subr.mxu0 0.0
    %84 = vmatpush2.msra.mxu0 0.0
    %85 = vmatprep.subr.mxu0 0.0
    %86 = vmatpush2.msra.mxu0 0.0
    %87 = vmatprep.subr.mxu0 0.0
    %88 = vmatpush2.msra.mxu0 0.0
    %89 = vmatprep.subr.mxu0 0.0
    %90 = vmatpush2.msra.mxu0 0.0
    %91 = vmatprep.mubr.f32.mxu0 0.0
    %92 = vmatmul.mubr.f32.gmra.mxu0 %v25
    %v93 = vpop.f32.mrf.mxu0
    %v94 = vadd.f32 %v22, %v93
    %v95 = vpop.f32.mrf.mxu0
    %96 = vdwg.mxu0
    %vm97 = vcmask 57344
    %98 = vst.msk [vmem:[#allocation3] sm:$0x1] %vm97, %v94
    // Predicated region
    $region14: #{tpu_custom_call.1} parent=1 // pred_check
      _
    $region15: #{tpu_custom_call.1} parent=1 // pred_check_branch
      %100 = sbr.rel (0) target = $region17
    $region16: #{tpu_custom_call.1} parent=1 // pred_region
      %s102 = ssub.s32 16, 16
      %103 = vsyncadd [#allocation4], %s102
      %s105 = sshll.u32 [#allocation3], 4
      %s106 = int_to_ptr.vmem [resolvable:$true] %s105
      %108 = dma.vmem_to_hbm [thread:$0]  %s106, 16, %s3, [#allocation4]
    $region17: #{tpu_custom_call.1} parent=1 // pred_fallthru
      _
    // Predicated region
    $region18: #{tpu_custom_call.1} parent=1 // pred_check
      _
    $region19: #{tpu_custom_call.1} parent=1 // pred_check_branch
      %110 = sbr.rel (0) target = $region21
    $region20: #{tpu_custom_call.1} parent=1 // pred_region
      %111 = dma.done [#allocation4], 16
    $region21: #{tpu_custom_call.1} parent=1 // pred_fallthru
      _
    %112 = vsyncpa [#allocation4], 1

</llo_original>
